<compile_context>
chip_gen: v7x
topology: tpu7x:2x2x1
jax: 0.10.0
libtpu: 0.0.40
codegen_flags: <defaults>
</compile_context>

<pallas_src>
import math

import jax
import jax.numpy as jnp
from jax.experimental import pallas as pl
from jax.experimental.pallas import tpu as pltpu


def _cdiv(a, b):
    return -(-a // b)


def _ceil_to(a, m):
    return _cdiv(a, m) * m


def _dyt_kernel(alpha_ref, gamma_ref, beta_ref, x_ref, o_ref):
    # alpha_ref: SMEM (1,) f32 scalar
    # gamma_ref, beta_ref: VMEM (1, tile_cols) f32
    # x_ref, o_ref: VMEM (tile_rows, tile_cols) in the caller's dtype
    a = alpha_ref[0]
    x = x_ref[...].astype(jnp.float32)
    # Single native EUP tanh; VPU mul/add ride under the HBM roofline.
    y = gamma_ref[...] * jnp.tanh(a * x) + beta_ref[...]
    o_ref[...] = y.astype(o_ref.dtype)


def _dyt_2d(x2, alpha_s, gamma_row, beta_row, *, tile_rows=None):
    """Runs the kernel on a 2-D slab x2[rows, lane_dim]."""
    rows, lane_dim = x2.shape
    dtype = x2.dtype
    itemsize = jnp.dtype(dtype).itemsize
    sub = max(8, 32 // itemsize)          # sublane multiple: 8 f32, 16 bf16, 32 int8
    target_bytes = 8 << 20                # ~8 MiB blocks: dbl-buffered in+out = 32 MiB

    # Column tile: full lane_dim unless one sublane-high band already blows the
    # budget (enormous emb_dim); keep a multiple of 128.
    if lane_dim % 128 == 0 and lane_dim * itemsize * sub > target_bytes:
        tile_cols = max(128, (target_bytes // (sub * itemsize)) // 128 * 128)
    else:
        tile_cols = lane_dim

    # Row tile: as large as the byte budget allows (no artificial row cap),
    # sublane-aligned, and with an even (>= 2) row-block count when the count
    # is small so both v7x TensorCores get equal work (best effort).
    if tile_rows is None:
        if rows <= sub:
            tile_rows = rows              # single small block (== full dim, legal)
        else:
            bytes_per_row = max(1, tile_cols * itemsize)
            tile_rows = max(sub, (target_bytes // bytes_per_row) // sub * sub)
            nblk = max(2, _cdiv(rows, tile_rows))
            if nblk < 8 and nblk % 2:
                nblk += 1
            tile_rows = min(tile_rows, max(sub, _ceil_to(_cdiv(rows, nblk), sub)))

    grid = (_cdiv(rows, tile_rows), _cdiv(lane_dim, tile_cols))

    gamma2 = gamma_row.reshape(1, lane_dim)
    beta2 = beta_row.reshape(1, lane_dim)

    return pl.pallas_call(
        _dyt_kernel,
        out_shape=jax.ShapeDtypeStruct((rows, lane_dim), dtype),
        grid_spec=pltpu.PrefetchScalarGridSpec(
            num_scalar_prefetch=0,
            grid=grid,
            in_specs=[
                pl.BlockSpec(memory_space=pltpu.MemorySpace.SMEM),             # alpha
                pl.BlockSpec((1, tile_cols), lambda i, j: (0, j)),             # gamma
                pl.BlockSpec((1, tile_cols), lambda i, j: (0, j)),             # beta
                pl.BlockSpec((tile_rows, tile_cols), lambda i, j: (i, j)),     # x
            ],
            out_specs=pl.BlockSpec((tile_rows, tile_cols), lambda i, j: (i, j)),
        ),
        compiler_params=pltpu.CompilerParams(
            dimension_semantics=("parallel", "parallel"),
            vmem_limit_bytes=48 * 1024 * 1024,   # safe on v5e/v6e (128 MiB) and v7x (64 MiB)
        ),
    )(alpha_s, gamma2, beta2, x2)


def dynamic_tanh_norm(x, alpha, gamma, beta, *, fold_lanes=True, tile_rows=None):
    """y = gamma * tanh(alpha * x) + beta, broadcast over the last axis."""
    orig_shape = x.shape
    emb_dim = orig_shape[-1]
    assert gamma.shape == (emb_dim,) and beta.shape == (emb_dim,)
    dtype = x.dtype

    # Parameters stay f32 (matches the PyTorch fp32-parameter module); the
    # kernel computes in f32 and only casts the final store to x.dtype.
    alpha_s = jnp.asarray(alpha, jnp.float32).reshape(1)
    gamma_f = jnp.asarray(gamma, jnp.float32)
    beta_f = jnp.asarray(beta, jnp.float32)

    x2 = x.reshape(-1, emb_dim)           # collapse leading dims (layout-preserving)
    rows = x2.shape[0]

    # Lane-dense fold: make the lane dim a multiple of 128 by folding k
    # contiguous rows into it so output stores are unmasked full-width vst.
    k = 1
    if fold_lanes and emb_dim % 128 != 0:
        kk = 128 // math.gcd(emb_dim, 128)
        if kk > 1 and rows >= kk:
            k = kk

    if k == 1:
        out2 = _dyt_2d(x2, alpha_s, gamma_f, beta_f, tile_rows=tile_rows)
        return out2.reshape(orig_shape)

    bulk = (rows // k) * k
    tail = rows - bulk

    # Bulk rows go through the folded, lane-dense path.
    # NOTE: verify in post-jit HLO that these reshapes fuse/bitcast rather than
    # emit full-tensor relayout copies; if they do not, call with
    # fold_lanes=False (masked stores beat extra HBM passes).
    xb = x2[:bulk].reshape(bulk // k, k * emb_dim)
    gb = jnp.tile(gamma_f, (k,))
    bb = jnp.tile(beta_f, (k,))
    yb = _dyt_2d(xb, alpha_s, gb, bb, tile_rows=tile_rows)
    yb = yb.reshape(bulk, emb_dim)

    if tail == 0:
        return yb.reshape(orig_shape)

    # Tail (< k rows, trivially small): plain XLA with identical f32 math so
    # the whole tensor still benefits from the lane-dense kernel path.
    xt = x2[bulk:].astype(jnp.float32)
    yt = (gamma_f * jnp.tanh(alpha_s[0] * xt) + beta_f).astype(dtype)
    return jnp.concatenate([yb, yt], axis=0).reshape(orig_shape)


if __name__ == "__main__":
    key = jax.random.PRNGKey(0)

    batch, seq, emb_dim = 2, 8, 32
    init_alpha = 0.5

    # Deterministic parameter init matching the PyTorch module's __init__.
    alpha = jnp.ones((1,), jnp.float32) * init_alpha    # nn.Parameter(torch.ones(1)*0.5)
    gamma = jnp.ones((emb_dim,), jnp.float32)           # nn.Parameter(torch.ones(emb_dim))
    beta = jnp.zeros((emb_dim,), jnp.float32)           # nn.Parameter(torch.zeros(emb_dim))

    x = jax.random.normal(key, (batch, seq, emb_dim), jnp.float32)
    y = jax.block_until_ready(dynamic_tanh_norm(x, alpha, gamma, beta))
    y_ref = gamma * jnp.tanh(alpha * x) + beta
    assert y.shape == x.shape
    assert jnp.allclose(y, y_ref, atol=1e-5, rtol=1e-5), "mismatch vs reference"

    # Lane-aligned (no-fold) path, exercising the large-tile / even 2-block split.
    x_big = jax.random.normal(jax.random.PRNGKey(1), (4, 64, 256), jnp.float32)
    g_big = jnp.ones((256,), jnp.float32) * 1.25
    b_big = jnp.ones((256,), jnp.float32) * 0.1
    y_big = jax.block_until_ready(dynamic_tanh_norm(x_big, alpha, g_big, b_big))
    y_big_ref = g_big * jnp.tanh(alpha * x_big) + b_big
    assert jnp.allclose(y_big, y_big_ref, atol=1e-5, rtol=1e-5), "mismatch vs reference (big)"

    # Folded path with a trailing tail (rows % k != 0): bulk via the kernel,
    # tiny tail via plain XLA.
    x_tl = jax.random.normal(jax.random.PRNGKey(2), (1, 18, emb_dim), jnp.float32)
    y_tl = jax.block_until_ready(dynamic_tanh_norm(x_tl, alpha, gamma, beta))
    y_tl_ref = gamma * jnp.tanh(alpha * x_tl) + beta
    assert jnp.allclose(y_tl, y_tl_ref, atol=1e-5, rtol=1e-5), "mismatch vs reference (tail)"

    print("KERNEL_OK")
</pallas_src>

<mosaic_0001>
module attributes {stable_mosaic.version = 11 : i64} {
  func.func @_dyt_kernel(%arg0: i32, %arg1: i32, %arg2: memref<1xf32, #tpu.memory_space<smem>>, %arg3: memref<1x128xf32, #tpu.memory_space<vmem>>, %arg4: memref<1x128xf32, #tpu.memory_space<vmem>>, %arg5: memref<4x128xf32, #tpu.memory_space<vmem>>, %arg6: memref<4x128xf32, #tpu.memory_space<vmem>>) attributes {dimension_semantics = [#tpu.dimension_semantics<parallel>, #tpu.dimension_semantics<parallel>], iteration_bounds = array<i64: 1, 1>, scalar_prefetch = 0 : i64, scratch_operands = 0 : i64, tpu.core_type = #tpu.core_type<tc>, window_params = [{transform_indices = @transform_0, window_bounds = array<i64: 1>}, {transform_indices = @transform_1, window_bounds = array<i64: 1, 128>}, {transform_indices = @transform_2, window_bounds = array<i64: 1, 128>}, {transform_indices = @transform_3, window_bounds = array<i64: 4, 128>}, {transform_indices = @transform_4, window_bounds = array<i64: 4, 128>}]} {
    %c0 = arith.constant 0 : index
    %0 = memref.load %arg2[%c0] : memref<1xf32, #tpu.memory_space<smem>>
    %c0_0 = arith.constant 0 : index
    %c0_1 = arith.constant 0 : index
    %1 = vector.load %arg5[%c0_0, %c0_1] : memref<4x128xf32, #tpu.memory_space<vmem>>, vector<4x128xf32>
    %c0_2 = arith.constant 0 : index
    %c0_3 = arith.constant 0 : index
    %2 = vector.load %arg3[%c0_2, %c0_3] : memref<1x128xf32, #tpu.memory_space<vmem>>, vector<1x128xf32>
    %3 = vector.broadcast %0 : f32 to vector<4x128xf32>
    %4 = arith.mulf %3, %1 : vector<4x128xf32>
    %5 = math.tanh %4 : vector<4x128xf32>
    %6 = vector.broadcast %2 : vector<1x128xf32> to vector<4x128xf32>
    %7 = arith.mulf %6, %5 : vector<4x128xf32>
    %c0_4 = arith.constant 0 : index
    %c0_5 = arith.constant 0 : index
    %8 = vector.load %arg4[%c0_4, %c0_5] : memref<1x128xf32, #tpu.memory_space<vmem>>, vector<1x128xf32>
    %9 = vector.broadcast %8 : vector<1x128xf32> to vector<4x128xf32>
    %10 = arith.addf %7, %9 : vector<4x128xf32>
    %c0_6 = arith.constant 0 : index
    %c0_7 = arith.constant 0 : index
    %11 = vector.load %arg6[%c0_6, %c0_7] : memref<4x128xf32, #tpu.memory_space<vmem>>, vector<4x128xf32>
    tpu.vector_store %arg6[%c0_6, %c0_7], %10 {strides = array<i32>} : memref<4x128xf32, #tpu.memory_space<vmem>>, vector<4x128xf32>,
    return
  }
  func.func @transform_0(%arg0: i32, %arg1: i32) -> i32 {
    %c0_i32 = arith.constant 0 : i32
    %c0_i32_0 = arith.constant 0 : i32
    return %c0_i32 : i32
  }
  func.func @transform_1(%arg0: i32, %arg1: i32) -> (i32, i32) {
    %c0_i32 = arith.constant 0 : i32
    %c0_i32_0 = arith.constant 0 : i32
    return %c0_i32, %arg1 : i32, i32
  }
  func.func @transform_2(%arg0: i32, %arg1: i32) -> (i32, i32) {
    %c0_i32 = arith.constant 0 : i32
    %c0_i32_0 = arith.constant 0 : i32
    return %c0_i32, %arg1 : i32, i32
  }
  func.func @transform_3(%arg0: i32, %arg1: i32) -> (i32, i32) {
    %c0_i32 = arith.constant 0 : i32
    return %arg0, %arg1 : i32, i32
  }
  func.func @transform_4(%arg0: i32, %arg1: i32) -> (i32, i32) {
    %c0_i32 = arith.constant 0 : i32
    return %arg0, %arg1 : i32, i32
  }
}

</mosaic_0001>

<llo_original>
// kernel: tpu_custom_call.1
$region0: #{tpu_custom_call.1}
  #allocation0 [shape = 'u32[]', space=smem, size = 0x4, offset = 0x4, fixed_abs, tag = 'smem constant byte address 0x4 - core index']
  #allocation1 [shape = 'u32[144,128]{1,0:T(1,128)}', space=vmem, size = 0x12000, scoped, tag = 'internal scratch']
  #allocation2 [shape = 'f32[1]{0:T(128)S(6)}', space=smem, size = 0x200, scoped, tag = 'scoped memory for tpu_custom_call.1']
  %s0 = inlined_call_operand.<no memory space> [shape: f32[1], index: 0, kind: input, shape index: {}]
  %s1 = inlined_call_operand.vmem [shape: f32[1,128], index: 1, kind: input, shape index: {}]
  %s2 = inlined_call_operand.vmem [shape: f32[1,128], index: 2, kind: input, shape index: {}]
  %s3 = inlined_call_operand.vmem [shape: f32[4,128], index: 3, kind: input, shape index: {}]
  %s4 = inlined_call_operand.hbm [shape: f32[4,128], index: 4, kind: output, shape index: {}]
  %s5 = sld [smem:[#allocation0]]
  $region26: #{tpu_custom_call.1} parent=0
    _
  %s7 = ssub.s32 1, %s5
  %s8 = scalar_select 0, %s7, %s5
  %9 = sst [smem:[#allocation2]] %s0
  $region1: #{tpu_custom_call.1} parent=0
    #allocation3 [shape = 'u8[2048]{0}', space=vmem, size = 0x800, scoped, tag = 'output window, operand 0, single buffered']
    #allocation4 [shape = 's32[1]{0}', space=sflag, size = 0x4, scoped, tag = 'scoped memory for tpu_custom_call.1']
    %10 = vsyncpa [#allocation4], 0
    // Predicated region
    $region2: #{tpu_custom_call.1} parent=1 // pred_check
      _
    $region3: #{tpu_custom_call.1} parent=1 // pred_check_branch
      %12 = sbr.rel (0) target = $region5
    $region4: #{tpu_custom_call.1} parent=1 // pred_region
      _
    $region5: #{tpu_custom_call.1} parent=1 // pred_fallthru
      _
    // Predicated region
    $region6: #{tpu_custom_call.1} parent=1 // pred_check
      _
    $region7: #{tpu_custom_call.1} parent=1 // pred_check_branch
      %14 = sbr.rel (0) target = $region9
    $region8: #{tpu_custom_call.1} parent=1 // pred_region
      _
    $region9: #{tpu_custom_call.1} parent=1 // pred_fallthru
      _
    // Predicated region
    $region10: #{tpu_custom_call.1} parent=1 // pred_check
      _
    $region11: #{tpu_custom_call.1} parent=1 // pred_check_branch
      %16 = sbr.rel (0) target = $region13
    $region12: #{tpu_custom_call.1} parent=1 // pred_region
      _
    $region13: #{tpu_custom_call.1} parent=1 // pred_fallthru
      _
    // Predicated region
    $region14: #{tpu_custom_call.1} parent=1 // pred_check
      _
    $region15: #{tpu_custom_call.1} parent=1 // pred_check_branch
      %18 = sbr.rel (0) target = $region17
    $region16: #{tpu_custom_call.1} parent=1 // pred_region
      _
    $region17: #{tpu_custom_call.1} parent=1 // pred_fallthru
      _
    %s19 = sld [smem:[#allocation2]]
    %v20 = vld [vmem:[%s3] sm:$0xf]
    %v21 = vld [vmem:[%s1] sm:$0x1]
    %v22 = vstv %s19
    %v23 = vmul.f32 %v22, %v20
    %v24 = vtanh.pop %v23
    %v26 = vlaneseq
    %v27 = vshrl.u32 %v26, 7
    %v28 = vsub.s32 0, %v27
    %v29 = vrot.slane %v21, %v28
    %v31 = vmul.f32 %v29, %v24
    %v32 = vld [vmem:[%s2] sm:$0x1]
    %v34 = vlaneseq
    %v35 = vshrl.u32 %v34, 7
    %v36 = vsub.s32 0, %v35
    %v37 = vrot.slane %v32, %v36
    %v39 = vadd.f32 %v31, %v37
    %40 = vst [vmem:[#allocation3] sm:$0xf] %v39
    // Predicated region
    $region18: #{tpu_custom_call.1} parent=1 // pred_check
      _
    $region19: #{tpu_custom_call.1} parent=1 // pred_check_branch
      %42 = sbr.rel (0) target = $region21
    $region20: #{tpu_custom_call.1} parent=1 // pred_region
      %s44 = ssub.s32 64, 64
      %45 = vsyncadd [#allocation4], %s44
      %s47 = sshll.u32 [#allocation3], 4
      %s48 = int_to_ptr.vmem [resolvable:$true] %s47
      %50 = dma.vmem_to_hbm [thread:$0]  %s48, 64, %s4, [#allocation4]
    $region21: #{tpu_custom_call.1} parent=1 // pred_fallthru
      _
    // Predicated region
    $region22: #{tpu_custom_call.1} parent=1 // pred_check
      _
    $region23: #{tpu_custom_call.1} parent=1 // pred_check_branch
      %52 = sbr.rel (0) target = $region25
    $region24: #{tpu_custom_call.1} parent=1 // pred_region
      %53 = dma.done [#allocation4], 64
    $region25: #{tpu_custom_call.1} parent=1 // pred_fallthru
      _
    %54 = vsyncpa [#allocation4], 1

</llo_original>
